<compile_context>
chip_gen: v5e
topology: v5e:2x2
jax: 0.10.0
libtpu: 0.0.40
codegen_flags: <defaults>
</compile_context>

<pallas_src>
import functools

import jax
import jax.numpy as jnp
from jax import lax
from jax.experimental import pallas as pl
from jax.experimental.pallas import tpu as pltpu


def _fused_resblock_kernel(x_hbm_ref, x_res_ref, t1_ref, g1_ref, be1_ref,
                           t2_ref, g2_ref, be2_ref, bm_ref, out_ref,
                           xpad_ref, dma_sem, *,
                           N, H, W, C, KH, dil, top, eps, mm_dtype):
    """Fused: conv1 -> BN1 -> ReLU -> conv2 -> BN2 -> +identity -> ReLU.

    All activations are kept in the lane-dense (rows, W*C) layout; the
    padded scratch pads only the H axis (W padding is folded into the
    block-Toeplitz weights).
    """
    WC = W * C
    M = N * H          # rows of the lane-dense activation
    MT = N * H * W     # elements per channel for BatchNorm statistics
    del MT  # (1/M already folded into bm_ref by the wrapper)

    # Stage-1 input: DMA straight from HBM into the padded-scratch interior.
    # `top` is a multiple of 8, so the destination is sublane-tile aligned.
    cp = pltpu.make_async_copy(x_hbm_ref, xpad_ref.at[:, top:top + H, :],
                               dma_sem)
    cp.start()

    # Zero only the dil-row borders the taps actually read; they stay zero
    # across both stages (each stage rewrites only the interior).
    border = jnp.zeros((N, dil, WC), jnp.float32)
    xpad_ref[:, top - dil:top, :] = border
    xpad_ref[:, top + H:top + H + dil, :] = border

    ones_row = jnp.ones((1, M), jnp.float32)

    def conv_bn(t_ref, g_ref, be_ref):
        # Dilated conv as KH full-lane MXU matmuls against per-kh
        # block-Toeplitz weights (K = Nout = W*C).  H padding comes from the
        # zero border rows of the scratch; W padding is inside t_ref.
        acc = jnp.zeros((M, WC), jnp.float32)
        for kh in range(KH):
            r0 = top - dil + kh * dil
            tap = xpad_ref[:, r0:r0 + H, :].reshape(M, WC)
            acc = acc + jnp.dot(tap.astype(mm_dtype), t_ref[kh],
                                preferred_element_type=jnp.float32)
        # NOTE: the conv bias is intentionally omitted -- a per-channel
        # constant added before training-mode BatchNorm is cancelled exactly
        # by the mean subtraction below.

        # BatchNorm2d (training) statistics in a single pass over acc:
        # per-channel sum / sum-of-squares as MXU row reductions, spread back
        # to the lane layout by the 1/M-scaled channel-pool matrix bm_ref.
        # Statistics stay f32 regardless of mm_dtype.
        colsum = jnp.dot(ones_row, acc, preferred_element_type=jnp.float32)
        colsq = jnp.dot(ones_row, acc * acc,
                        preferred_element_type=jnp.float32)
        mean = jnp.dot(colsum, bm_ref[...],
                       preferred_element_type=jnp.float32)       # (1, WC)
        ex2 = jnp.dot(colsq, bm_ref[...],
                      preferred_element_type=jnp.float32)        # (1, WC)
        var = ex2 - mean * mean                                  # biased
        return (acc - mean) * lax.rsqrt(var + eps) * g_ref[...] + be_ref[...]

    cp.wait()
    y1 = jnp.maximum(conv_bn(t1_ref, g1_ref, be1_ref), 0.0)

    # Stage-2 input overwrites the scratch interior (tile-aligned, full-lane
    # stores); the zero borders are untouched.
    xpad_ref[:, top:top + H, :] = y1.reshape(N, H, WC)

    y2 = conv_bn(t2_ref, g2_ref, be2_ref)

    # Epilogue stays lane-dense: residual add + final ReLU, full-lane store.
    out_ref[...] = jnp.maximum(y2 + x_res_ref[...], 0.0)


def _block_toeplitz(w, W, dil, pad):
    """torch-layout (O, I, KH, KW) conv weight -> (KH, W*I, W*O) block-
    Toeplitz matrices acting on the lane-flattened (w, c) axis.  The
    W-direction zero padding is folded in by omitting out-of-range blocks."""
    O, I, KH, KW = w.shape
    idx = jnp.arange(W)
    mats = []
    for kh in range(KH):
        t = jnp.zeros((W * I, W * O), jnp.float32)
        for kw in range(KW):
            off = kw * dil - pad
            # shift[w_in, w_out] = 1 iff w_in == w_out + off (and in range)
            shift = (idx[:, None] == idx[None, :] + off).astype(jnp.float32)
            t = t + jnp.kron(shift, w[:, :, kh, kw].T.astype(jnp.float32))
        mats.append(t)
    return jnp.stack(mats, axis=0)


def res_block_dilated(x_nchw, params, *, size=3, dil=2, eps=1e-5,
                      matmul_dtype=jnp.float32):
    """Forward pass of ResBlockDilated. x_nchw: (N, C, H, W) float32.

    matmul_dtype=jnp.bfloat16 feeds the MXU bf16 conv inputs (accumulation
    and BatchNorm statistics stay f32) -- recommended on v5e/v6e/v7x; the
    exact f32 path is the default.
    """
    w1, b1, g1, be1, w2, b2, g2, be2 = params
    del b1, b2  # conv biases are cancelled by training-mode BatchNorm
    N, C, H, W = x_nchw.shape
    if dil * (size - 1) != 2 * dil:
        raise ValueError("residual add requires size == 3 (spatial preserved)")
    WC = W * C
    M_total = N * H * W

    x_nhwc = jnp.transpose(x_nchw, (0, 2, 3, 1)).astype(jnp.float32)
    x_any = x_nhwc.reshape(N, H, WC)        # HBM source for the scratch DMA
    x_res = x_nhwc.reshape(N * H, WC)       # lane-dense copy for the residual

    # Per-kh block-Toeplitz conv weights, cast to the MXU dtype here (not in
    # the kernel).
    t1 = _block_toeplitz(w1, W, dil, dil).astype(matmul_dtype)
    t2 = _block_toeplitz(w2, W, dil, dil).astype(matmul_dtype)

    # Channel-pool / broadcast matrix for BN stats, pre-scaled by 1/M.
    bm = jnp.kron(jnp.ones((W, W), jnp.float32),
                  jnp.eye(C, dtype=jnp.float32)) * (1.0 / float(M_total))

    def lane_row(v):  # per-channel (C,) vector -> lane-tiled (1, W*C) row
        return jnp.tile(v.reshape(1, C).astype(jnp.float32), (1, W))

    # Sublane-aligned start row of the scratch interior (>= dil, multiple of 8).
    top = ((dil + 7) // 8) * 8

    kernel = functools.partial(
        _fused_resblock_kernel, N=N, H=H, W=W, C=C, KH=size, dil=dil,
        top=top, eps=eps, mm_dtype=matmul_dtype)

    out_ld = pl.pallas_call(
        kernel,
        out_shape=jax.ShapeDtypeStruct((N * H, WC), jnp.float32),
        in_specs=[pl.BlockSpec(memory_space=pl.ANY)]
        + [pl.BlockSpec(memory_space=pltpu.MemorySpace.VMEM)] * 8,
        out_specs=pl.BlockSpec(memory_space=pltpu.MemorySpace.VMEM),
        scratch_shapes=[
            pltpu.VMEM((N, top + H + dil, WC), jnp.float32),
            pltpu.SemaphoreType.DMA,
        ],
    )(x_any, x_res, t1, lane_row(g1), lane_row(be1),
      t2, lane_row(g2), lane_row(be2), bm)

    return jnp.transpose(out_ld.reshape(N, H, W, C), (0, 3, 1, 2))  # -> NCHW


def res_block_dilated_reference(x, params, *, size=3, dil=2, eps=1e-5):
    """Pure-JAX (XLA) reference matching PyTorch forward semantics."""
    w1, b1, g1, be1, w2, b2, g2, be2 = params

    def conv(x, w, b):
        y = lax.conv_general_dilated(
            x, w, window_strides=(1, 1),
            padding=[(dil, dil), (dil, dil)],
            rhs_dilation=(dil, dil),
            dimension_numbers=('NCHW', 'OIHW', 'NCHW'))
        return y + b[None, :, None, None]

    def bn(y, g, be):
        mean = jnp.mean(y, axis=(0, 2, 3), keepdims=True)
        var = jnp.mean((y - mean) ** 2, axis=(0, 2, 3), keepdims=True)
        return (y - mean) / jnp.sqrt(var + eps) * g[None, :, None, None] \
            + be[None, :, None, None]

    h = jax.nn.relu(bn(conv(x, w1, b1), g1, be1))
    h = bn(conv(h, w2, b2), g2, be2)
    return jax.nn.relu(h + x)


if __name__ == "__main__":
    # small shapes: batch=2, hidden channels=8, spatial 16x16, kernel 3, dil=2
    # (W * C = 128 -> fully lane-dense internal layout)
    N, C, H, W = 2, 8, 16, 16
    size, dil = 3, 2

    key = jax.random.PRNGKey(0)
    ks = jax.random.split(key, 9)
    x = jax.random.normal(ks[0], (N, C, H, W), jnp.float32)
    w1 = 0.1 * jax.random.normal(ks[1], (C, C, size, size), jnp.float32)
    b1 = 0.1 * jax.random.normal(ks[2], (C,), jnp.float32)
    g1 = 1.0 + 0.1 * jax.random.normal(ks[3], (C,), jnp.float32)
    be1 = 0.1 * jax.random.normal(ks[4], (C,), jnp.float32)
    w2 = 0.1 * jax.random.normal(ks[5], (C, C, size, size), jnp.float32)
    b2 = 0.1 * jax.random.normal(ks[6], (C,), jnp.float32)
    g2 = 1.0 + 0.1 * jax.random.normal(ks[7], (C,), jnp.float32)
    be2 = 0.1 * jax.random.normal(ks[8], (C,), jnp.float32)
    params = (w1, b1, g1, be1, w2, b2, g2, be2)

    ref = jax.block_until_ready(
        res_block_dilated_reference(x, params, size=size, dil=dil))

    # f32 MXU path (exact semantics).
    out = jax.block_until_ready(
        res_block_dilated(x, params, size=size, dil=dil))
    assert out.shape == (N, C, H, W)
    if not jnp.allclose(out, ref, atol=2e-3, rtol=2e-3):
        raise AssertionError(
            f"f32 mismatch, max abs err = {float(jnp.max(jnp.abs(out - ref)))}")

    # bf16 MXU-input path (recommended on v5e/v6e/v7x). Accumulation and BN
    # statistics stay f32, so only a loose sanity tolerance applies to this
    # reduced-precision variant.
    out_bf16 = jax.block_until_ready(
        res_block_dilated(x, params, size=size, dil=dil,
                          matmul_dtype=jnp.bfloat16))
    if not jnp.allclose(out_bf16, ref, atol=1e-1, rtol=1e-1):
        raise AssertionError(
            "bf16 mismatch, max abs err = "
            f"{float(jnp.max(jnp.abs(out_bf16 - ref)))}")

    print("KERNEL_OK")
</pallas_src>

<mosaic_0001>
module attributes {stable_mosaic.version = 11 : i64} {
  func.func @_fused_resblock_kernel(%arg0: memref<2x16x128xf32, #tpu.memory_space<any>>, %arg1: memref<32x128xf32, #tpu.memory_space<vmem>>, %arg2: memref<3x128x128xf32, #tpu.memory_space<vmem>>, %arg3: memref<1x128xf32, #tpu.memory_space<vmem>>, %arg4: memref<1x128xf32, #tpu.memory_space<vmem>>, %arg5: memref<3x128x128xf32, #tpu.memory_space<vmem>>, %arg6: memref<1x128xf32, #tpu.memory_space<vmem>>, %arg7: memref<1x128xf32, #tpu.memory_space<vmem>>, %arg8: memref<128x128xf32, #tpu.memory_space<vmem>>, %arg9: memref<32x128xf32, #tpu.memory_space<vmem>>, %arg10: memref<2x26x128xf32, #tpu.memory_space<vmem>>, %arg11: memref<!tpu.dma_semaphore, #tpu.memory_space<semaphore_mem>>) attributes {dimension_semantics = [], scalar_prefetch = 0 : i64, scratch_operands = 2 : i64, tpu.core_type = #tpu.core_type<tc>} {
    %c0_i32 = arith.constant 0 : i32
    %c8_i32 = arith.constant 8 : i32
    %c0_i32_0 = arith.constant 0 : i32
    %0 = tpu.memref_slice %arg10[%c0_i32, %c8_i32, %c0_i32_0] : memref<2x26x128xf32, #tpu.memory_space<vmem>> -> memref<2x16x128xf32, #tpu.memory_space<vmem>>
    tpu.enqueue_dma source(%arg0 : memref<2x16x128xf32, #tpu.memory_space<any>>) target(%0 : memref<2x16x128xf32, #tpu.memory_space<vmem>>) target_semaphore(%arg11 : memref<!tpu.dma_semaphore, #tpu.memory_space<semaphore_mem>>)
    %cst = arith.constant 0.000000e+00 : f32
    %1 = vector.broadcast %cst : f32 to vector<2x2x128xf32>
    %c0 = arith.constant 0 : index
    %c6 = arith.constant 6 : index
    %c0_1 = arith.constant 0 : index
    %2 = vector.load %arg10[%c0, %c6, %c0_1] : memref<2x26x128xf32, #tpu.memory_space<vmem>>, vector<2x2x128xf32>
    tpu.vector_store %arg10[%c0, %c6, %c0_1], %1 {strides = array<i32>} : memref<2x26x128xf32, #tpu.memory_space<vmem>>, vector<2x2x128xf32>,
    %c0_2 = arith.constant 0 : index
    %c24 = arith.constant 24 : index
    %c0_3 = arith.constant 0 : index
    %3 = vector.load %arg10[%c0_2, %c24, %c0_3] : memref<2x26x128xf32, #tpu.memory_space<vmem>>, vector<2x2x128xf32>
    tpu.vector_store %arg10[%c0_2, %c24, %c0_3], %1 {strides = array<i32>} : memref<2x26x128xf32, #tpu.memory_space<vmem>>, vector<2x2x128xf32>,
    %cst_4 = arith.constant 1.000000e+00 : f32
    %4 = vector.broadcast %cst_4 : f32 to vector<1x32xf32>
    %c0_i32_5 = arith.constant 0 : i32
    %c8_i32_6 = arith.constant 8 : i32
    %c0_i32_7 = arith.constant 0 : i32
    %5 = tpu.memref_slice %arg10[%c0_i32_5, %c8_i32_6, %c0_i32_7] : memref<2x26x128xf32, #tpu.memory_space<vmem>> -> memref<2x16x128xf32, #tpu.memory_space<vmem>>
    tpu.wait_dma2 semaphore(%arg11 : memref<!tpu.dma_semaphore, #tpu.memory_space<semaphore_mem>>) src(%arg0 : memref<2x16x128xf32, #tpu.memory_space<any>>) dst(%5 : memref<2x16x128xf32, #tpu.memory_space<vmem>>)
    %cst_8 = arith.constant 0.000000e+00 : f32
    %6 = vector.broadcast %cst_8 : f32 to vector<32x128xf32>
    %c0_9 = arith.constant 0 : index
    %c6_10 = arith.constant 6 : index
    %c0_11 = arith.constant 0 : index
    %7 = vector.load %arg10[%c0_9, %c6_10, %c0_11] : memref<2x26x128xf32, #tpu.memory_space<vmem>>, vector<2x16x128xf32>
    %8 = vector.shape_cast %7 : vector<2x16x128xf32> to vector<32x128xf32>
    %c0_12 = arith.constant 0 : index
    %c0_13 = arith.constant 0 : index
    %c0_14 = arith.constant 0 : index
    %9 = vector.load %arg2[%c0_12, %c0_13, %c0_14] : memref<3x128x128xf32, #tpu.memory_space<vmem>>, vector<1x128x128xf32>
    %10 = vector.shape_cast %9 : vector<1x128x128xf32> to vector<128x128xf32>
    %cst_15 = arith.constant dense<0.000000e+00> : vector<32x128xf32>
    %11 = tpu.matmul %8, %10, %cst_15 {dimension_numbers = #tpu.dot_dimension_numbers<[1], [0], [0], [1], [0, 0, 1, 1], [], []>} : vector<32x128xf32>, vector<128x128xf32>, vector<32x128xf32> -> vector<32x128xf32>
    %12 = arith.addf %6, %11 : vector<32x128xf32>
    %c0_16 = arith.constant 0 : index
    %c8 = arith.constant 8 : index
    %c0_17 = arith.constant 0 : index
    %13 = vector.load %arg10[%c0_16, %c8, %c0_17] : memref<2x26x128xf32, #tpu.memory_space<vmem>>, vector<2x16x128xf32>
    %14 = vector.shape_cast %13 : vector<2x16x128xf32> to vector<32x128xf32>
    %c1 = arith.constant 1 : index
    %c0_18 = arith.constant 0 : index
    %c0_19 = arith.constant 0 : index
    %15 = vector.load %arg2[%c1, %c0_18, %c0_19] : memref<3x128x128xf32, #tpu.memory_space<vmem>>, vector<1x128x128xf32>
    %16 = vector.shape_cast %15 : vector<1x128x128xf32> to vector<128x128xf32>
    %cst_20 = arith.constant dense<0.000000e+00> : vector<32x128xf32>
    %17 = tpu.matmul %14, %16, %cst_20 {dimension_numbers = #tpu.dot_dimension_numbers<[1], [0], [0], [1], [0, 0, 1, 1], [], []>} : vector<32x128xf32>, vector<128x128xf32>, vector<32x128xf32> -> vector<32x128xf32>
    %18 = arith.addf %12, %17 : vector<32x128xf32>
    %c0_21 = arith.constant 0 : index
    %c10 = arith.constant 10 : index
    %c0_22 = arith.constant 0 : index
    %19 = vector.load %arg10[%c0_21, %c10, %c0_22] : memref<2x26x128xf32, #tpu.memory_space<vmem>>, vector<2x16x128xf32>
    %20 = vector.shape_cast %19 : vector<2x16x128xf32> to vector<32x128xf32>
    %c2 = arith.constant 2 : index
    %c0_23 = arith.constant 0 : index
    %c0_24 = arith.constant 0 : index
    %21 = vector.load %arg2[%c2, %c0_23, %c0_24] : memref<3x128x128xf32, #tpu.memory_space<vmem>>, vector<1x128x128xf32>
    %22 = vector.shape_cast %21 : vector<1x128x128xf32> to vector<128x128xf32>
    %cst_25 = arith.constant dense<0.000000e+00> : vector<32x128xf32>
    %23 = tpu.matmul %20, %22, %cst_25 {dimension_numbers = #tpu.dot_dimension_numbers<[1], [0], [0], [1], [0, 0, 1, 1], [], []>} : vector<32x128xf32>, vector<128x128xf32>, vector<32x128xf32> -> vector<32x128xf32>
    %24 = arith.addf %18, %23 : vector<32x128xf32>
    %cst_26 = arith.constant dense<0.000000e+00> : vector<1x128xf32>
    %25 = tpu.matmul %4, %24, %cst_26 {dimension_numbers = #tpu.dot_dimension_numbers<[1], [0], [0], [1], [0, 0, 1, 1], [], []>} : vector<1x32xf32>, vector<32x128xf32>, vector<1x128xf32> -> vector<1x128xf32>
    %26 = arith.mulf %24, %24 : vector<32x128xf32>
    %cst_27 = arith.constant dense<0.000000e+00> : vector<1x128xf32>
    %27 = tpu.matmul %4, %26, %cst_27 {dimension_numbers = #tpu.dot_dimension_numbers<[1], [0], [0], [1], [0, 0, 1, 1], [], []>} : vector<1x32xf32>, vector<32x128xf32>, vector<1x128xf32> -> vector<1x128xf32>
    %c0_28 = arith.constant 0 : index
    %c0_29 = arith.constant 0 : index
    %28 = vector.load %arg8[%c0_28, %c0_29] : memref<128x128xf32, #tpu.memory_space<vmem>>, vector<128x128xf32>
    %cst_30 = arith.constant dense<0.000000e+00> : vector<1x128xf32>
    %29 = tpu.matmul %25, %28, %cst_30 {dimension_numbers = #tpu.dot_dimension_numbers<[1], [0], [0], [1], [0, 0, 1, 1], [], []>} : vector<1x128xf32>, vector<128x128xf32>, vector<1x128xf32> -> vector<1x128xf32>
    %c0_31 = arith.constant 0 : index
    %c0_32 = arith.constant 0 : index
    %30 = vector.load %arg8[%c0_31, %c0_32] : memref<128x128xf32, #tpu.memory_space<vmem>>, vector<128x128xf32>
    %cst_33 = arith.constant dense<0.000000e+00> : vector<1x128xf32>
    %31 = tpu.matmul %27, %30, %cst_33 {dimension_numbers = #tpu.dot_dimension_numbers<[1], [0], [0], [1], [0, 0, 1, 1], [], []>} : vector<1x128xf32>, vector<128x128xf32>, vector<1x128xf32> -> vector<1x128xf32>
    %32 = arith.mulf %29, %29 : vector<1x128xf32>
    %33 = arith.subf %31, %32 : vector<1x128xf32>
    %34 = vector.broadcast %29 : vector<1x128xf32> to vector<32x128xf32>
    %35 = arith.subf %24, %34 : vector<32x128xf32>
    %cst_34 = arith.constant 9.99999974E-6 : f32
    %36 = vector.broadcast %cst_34 : f32 to vector<1x128xf32>
    %37 = arith.addf %33, %36 : vector<1x128xf32>
    %38 = math.rsqrt %37 : vector<1x128xf32>
    %39 = vector.broadcast %38 : vector<1x128xf32> to vector<32x128xf32>
    %40 = arith.mulf %35, %39 : vector<32x128xf32>
    %c0_35 = arith.constant 0 : index
    %c0_36 = arith.constant 0 : index
    %41 = vector.load %arg3[%c0_35, %c0_36] : memref<1x128xf32, #tpu.memory_space<vmem>>, vector<1x128xf32>
    %42 = vector.broadcast %41 : vector<1x128xf32> to vector<32x128xf32>
    %43 = arith.mulf %40, %42 : vector<32x128xf32>
    %c0_37 = arith.constant 0 : index
    %c0_38 = arith.constant 0 : index
    %44 = vector.load %arg4[%c0_37, %c0_38] : memref<1x128xf32, #tpu.memory_space<vmem>>, vector<1x128xf32>
    %45 = vector.broadcast %44 : vector<1x128xf32> to vector<32x128xf32>
    %46 = arith.addf %43, %45 : vector<32x128xf32>
    %cst_39 = arith.constant 0.000000e+00 : f32
    %47 = vector.broadcast %cst_39 : f32 to vector<32x128xf32>
    %48 = arith.maximumf %46, %47 : vector<32x128xf32>
    %49 = vector.shape_cast %48 : vector<32x128xf32> to vector<2x16x128xf32>
    %c0_40 = arith.constant 0 : index
    %c8_41 = arith.constant 8 : index
    %c0_42 = arith.constant 0 : index
    %50 = vector.load %arg10[%c0_40, %c8_41, %c0_42] : memref<2x26x128xf32, #tpu.memory_space<vmem>>, vector<2x16x128xf32>
    tpu.vector_store %arg10[%c0_40, %c8_41, %c0_42], %49 {strides = array<i32>} : memref<2x26x128xf32, #tpu.memory_space<vmem>>, vector<2x16x128xf32>,
    %cst_43 = arith.constant 0.000000e+00 : f32
    %51 = vector.broadcast %cst_43 : f32 to vector<32x128xf32>
    %c0_44 = arith.constant 0 : index
    %c6_45 = arith.constant 6 : index
    %c0_46 = arith.constant 0 : index
    %52 = vector.load %arg10[%c0_44, %c6_45, %c0_46] : memref<2x26x128xf32, #tpu.memory_space<vmem>>, vector<2x16x128xf32>
    %53 = vector.shape_cast %52 : vector<2x16x128xf32> to vector<32x128xf32>
    %c0_47 = arith.constant 0 : index
    %c0_48 = arith.constant 0 : index
    %c0_49 = arith.constant 0 : index
    %54 = vector.load %arg5[%c0_47, %c0_48, %c0_49] : memref<3x128x128xf32, #tpu.memory_space<vmem>>, vector<1x128x128xf32>
    %55 = vector.shape_cast %54 : vector<1x128x128xf32> to vector<128x128xf32>
    %cst_50 = arith.constant dense<0.000000e+00> : vector<32x128xf32>
    %56 = tpu.matmul %53, %55, %cst_50 {dimension_numbers = #tpu.dot_dimension_numbers<[1], [0], [0], [1], [0, 0, 1, 1], [], []>} : vector<32x128xf32>, vector<128x128xf32>, vector<32x128xf32> -> vector<32x128xf32>
    %57 = arith.addf %51, %56 : vector<32x128xf32>
    %c0_51 = arith.constant 0 : index
    %c8_52 = arith.constant 8 : index
    %c0_53 = arith.constant 0 : index
    %58 = vector.load %arg10[%c0_51, %c8_52, %c0_53] : memref<2x26x128xf32, #tpu.memory_space<vmem>>, vector<2x16x128xf32>
    %59 = vector.shape_cast %58 : vector<2x16x128xf32> to vector<32x128xf32>
    %c1_54 = arith.constant 1 : index
    %c0_55 = arith.constant 0 : index
    %c0_56 = arith.constant 0 : index
    %60 = vector.load %arg5[%c1_54, %c0_55, %c0_56] : memref<3x128x128xf32, #tpu.memory_space<vmem>>, vector<1x128x128xf32>
    %61 = vector.shape_cast %60 : vector<1x128x128xf32> to vector<128x128xf32>
    %cst_57 = arith.constant dense<0.000000e+00> : vector<32x128xf32>
    %62 = tpu.matmul %59, %61, %cst_57 {dimension_numbers = #tpu.dot_dimension_numbers<[1], [0], [0], [1], [0, 0, 1, 1], [], []>} : vector<32x128xf32>, vector<128x128xf32>, vector<32x128xf32> -> vector<32x128xf32>
    %63 = arith.addf %57, %62 : vector<32x128xf32>
    %c0_58 = arith.constant 0 : index
    %c10_59 = arith.constant 10 : index
    %c0_60 = arith.constant 0 : index
    %64 = vector.load %arg10[%c0_58, %c10_59, %c0_60] : memref<2x26x128xf32, #tpu.memory_space<vmem>>, vector<2x16x128xf32>
    %65 = vector.shape_cast %64 : vector<2x16x128xf32> to vector<32x128xf32>
    %c2_61 = arith.constant 2 : index
    %c0_62 = arith.constant 0 : index
    %c0_63 = arith.constant 0 : index
    %66 = vector.load %arg5[%c2_61, %c0_62, %c0_63] : memref<3x128x128xf32, #tpu.memory_space<vmem>>, vector<1x128x128xf32>
    %67 = vector.shape_cast %66 : vector<1x128x128xf32> to vector<128x128xf32>
    %cst_64 = arith.constant dense<0.000000e+00> : vector<32x128xf32>
    %68 = tpu.matmul %65, %67, %cst_64 {dimension_numbers = #tpu.dot_dimension_numbers<[1], [0], [0], [1], [0, 0, 1, 1], [], []>} : vector<32x128xf32>, vector<128x128xf32>, vector<32x128xf32> -> vector<32x128xf32>
    %69 = arith.addf %63, %68 : vector<32x128xf32>
    %cst_65 = arith.constant dense<0.000000e+00> : vector<1x128xf32>
    %70 = tpu.matmul %4, %69, %cst_65 {dimension_numbers = #tpu.dot_dimension_numbers<[1], [0], [0], [1], [0, 0, 1, 1], [], []>} : vector<1x32xf32>, vector<32x128xf32>, vector<1x128xf32> -> vector<1x128xf32>
    %71 = arith.mulf %69, %69 : vector<32x128xf32>
    %cst_66 = arith.constant dense<0.000000e+00> : vector<1x128xf32>
    %72 = tpu.matmul %4, %71, %cst_66 {dimension_numbers = #tpu.dot_dimension_numbers<[1], [0], [0], [1], [0, 0, 1, 1], [], []>} : vector<1x32xf32>, vector<32x128xf32>, vector<1x128xf32> -> vector<1x128xf32>
    %c0_67 = arith.constant 0 : index
    %c0_68 = arith.constant 0 : index
    %73 = vector.load %arg8[%c0_67, %c0_68] : memref<128x128xf32, #tpu.memory_space<vmem>>, vector<128x128xf32>
    %cst_69 = arith.constant dense<0.000000e+00> : vector<1x128xf32>
    %74 = tpu.matmul %70, %73, %cst_69 {dimension_numbers = #tpu.dot_dimension_numbers<[1], [0], [0], [1], [0, 0, 1, 1], [], []>} : vector<1x128xf32>, vector<128x128xf32>, vector<1x128xf32> -> vector<1x128xf32>
    %c0_70 = arith.constant 0 : index
    %c0_71 = arith.constant 0 : index
    %75 = vector.load %arg8[%c0_70, %c0_71] : memref<128x128xf32, #tpu.memory_space<vmem>>, vector<128x128xf32>
    %cst_72 = arith.constant dense<0.000000e+00> : vector<1x128xf32>
    %76 = tpu.matmul %72, %75, %cst_72 {dimension_numbers = #tpu.dot_dimension_numbers<[1], [0], [0], [1], [0, 0, 1, 1], [], []>} : vector<1x128xf32>, vector<128x128xf32>, vector<1x128xf32> -> vector<1x128xf32>
    %77 = arith.mulf %74, %74 : vector<1x128xf32>
    %78 = arith.subf %76, %77 : vector<1x128xf32>
    %79 = vector.broadcast %74 : vector<1x128xf32> to vector<32x128xf32>
    %80 = arith.subf %69, %79 : vector<32x128xf32>
    %cst_73 = arith.constant 9.99999974E-6 : f32
    %81 = vector.broadcast %cst_73 : f32 to vector<1x128xf32>
    %82 = arith.addf %78, %81 : vector<1x128xf32>
    %83 = math.rsqrt %82 : vector<1x128xf32>
    %84 = vector.broadcast %83 : vector<1x128xf32> to vector<32x128xf32>
    %85 = arith.mulf %80, %84 : vector<32x128xf32>
    %c0_74 = arith.constant 0 : index
    %c0_75 = arith.constant 0 : index
    %86 = vector.load %arg6[%c0_74, %c0_75] : memref<1x128xf32, #tpu.memory_space<vmem>>, vector<1x128xf32>
    %87 = vector.broadcast %86 : vector<1x128xf32> to vector<32x128xf32>
    %88 = arith.mulf %85, %87 : vector<32x128xf32>
    %c0_76 = arith.constant 0 : index
    %c0_77 = arith.constant 0 : index
    %89 = vector.load %arg7[%c0_76, %c0_77] : memref<1x128xf32, #tpu.memory_space<vmem>>, vector<1x128xf32>
    %90 = vector.broadcast %89 : vector<1x128xf32> to vector<32x128xf32>
    %91 = arith.addf %88, %90 : vector<32x128xf32>
    %c0_78 = arith.constant 0 : index
    %c0_79 = arith.constant 0 : index
    %92 = vector.load %arg1[%c0_78, %c0_79] : memref<32x128xf32, #tpu.memory_space<vmem>>, vector<32x128xf32>
    %93 = arith.addf %91, %92 : vector<32x128xf32>
    %cst_80 = arith.constant 0.000000e+00 : f32
    %94 = vector.broadcast %cst_80 : f32 to vector<32x128xf32>
    %95 = arith.maximumf %93, %94 : vector<32x128xf32>
    %c0_81 = arith.constant 0 : index
    %c0_82 = arith.constant 0 : index
    %96 = vector.load %arg9[%c0_81, %c0_82] : memref<32x128xf32, #tpu.memory_space<vmem>>, vector<32x128xf32>
    tpu.vector_store %arg9[%c0_81, %c0_82], %95 {strides = array<i32>} : memref<32x128xf32, #tpu.memory_space<vmem>>, vector<32x128xf32>,
    return
  }
}

</mosaic_0001>

<llo_original>
// kernel: tpu_custom_call.1
$region0: #{tpu_custom_call.1}
  #allocation0 [shape = 'u32[]', space=smem, size = 0x4, offset = 0x4, fixed_abs, tag = 'smem constant byte address 0x4 - core index']
  #allocation1 [shape = 'u32[72,128]{1,0:T(1,128)}', space=vmem, size = 0x9000, scoped, tag = 'internal scratch']
  #allocation2 [shape = 'f32[2,26,128]{2,1,0:T(8,128)}', space=vmem, size = 0x8000, scoped, tag = 'scratch operand']
  #allocation3 [shape = 's32[1]{0}', space=sflag, size = 0x4, scoped, tag = 'scratch operand']
  #allocation13 [shape = 's32[]', space=sflag, size = 0x4, offset = 0, fixed_abs, tag = 'sflag constant byte address 0x0 - dummy sync flag']
  %s0 = inlined_call_operand.hbm [shape: f32[2,16,128], index: 0, kind: input, shape index: {}]
  %s1 = inlined_call_operand.hbm [shape: f32[32,128], index: 1, kind: input, shape index: {}]
  %s2 = inlined_call_operand.hbm [shape: f32[3,128,128], index: 2, kind: input, shape index: {}]
  %s3 = inlined_call_operand.vmem [shape: f32[1,128], index: 3, kind: input, shape index: {}]
  %s4 = inlined_call_operand.vmem [shape: f32[1,128], index: 4, kind: input, shape index: {}]
  %s5 = inlined_call_operand.hbm [shape: f32[3,128,128], index: 5, kind: input, shape index: {}]
  %s6 = inlined_call_operand.vmem [shape: f32[1,128], index: 6, kind: input, shape index: {}]
  %s7 = inlined_call_operand.vmem [shape: f32[1,128], index: 7, kind: input, shape index: {}]
  %s8 = inlined_call_operand.hbm [shape: f32[128,128], index: 8, kind: input, shape index: {}]
  %s9 = inlined_call_operand.hbm [shape: f32[32,128], index: 9, kind: output, shape index: {}]
  %s10 = sld [smem:[#allocation0]]
  $region58: #{tpu_custom_call.1} parent=0
    _
  %s12 = ssub.s32 1, %s10
  %s13 = scalar_select 0, %s12, %s10
  $region1: #{tpu_custom_call.1} parent=0
    #allocation4 [shape = 'u8[16384]{0}', space=vmem, size = 0x4000, scoped, tag = 'input window, operand 1, single buffered']
    #allocation5 [shape = 's32[1]{0}', space=sflag, size = 0x4, scoped, tag = 'scoped memory for tpu_custom_call.1']
    #allocation6 [shape = 's32[1]{0}', space=sflag, size = 0x4, scoped, tag = 'scoped memory for tpu_custom_call.1']
    #allocation7 [shape = 'u8[196608]{0}', space=vmem, size = 0x30000, scoped, tag = 'input window, operand 2, single buffered']
    #allocation8 [shape = 's32[1]{0}', space=sflag, size = 0x4, scoped, tag = 'scoped memory for tpu_custom_call.1']
    #allocation9 [shape = 'u8[196608]{0}', space=vmem, size = 0x30000, scoped, tag = 'input window, operand 5, single buffered']
    #allocation10 [shape = 'u8[65536]{0}', space=vmem, size = 0x10000, scoped, tag = 'input window, operand 8, single buffered']
    #allocation11 [shape = 's32[1]{0}', space=sflag, size = 0x4, scoped, tag = 'scoped memory for tpu_custom_call.1']
    #allocation12 [shape = 'u8[16384]{0}', space=vmem, size = 0x4000, scoped, tag = 'output window, operand 0, single buffered']
    %14 = vsyncpa [#allocation5], 0
    %15 = vsyncpa [#allocation8], 0
    %16 = vsyncpa [#allocation11], 0
    %17 = vsyncpa [#allocation6], 0
    // Predicated region
    $region2: #{tpu_custom_call.1} parent=1 // pred_check
      _
    $region3: #{tpu_custom_call.1} parent=1 // pred_check_branch
      %19 = sbr.rel (0) target = $region5
    $region4: #{tpu_custom_call.1} parent=1 // pred_region
      %21 = vsyncadd [#allocation5], 0
      %s22 = sshll.u32 %s1, 4
      %s23 = int_to_ptr.hbm [resolvable:$true] %s22
      %s24 = sshll.u32 [#allocation4], 4
      %s25 = int_to_ptr.vmem [resolvable:$true] %s24
      %30 = dma.hbm_to_vmem [thread:$0]  %s23, 512, %s25, [#allocation5], 128, 128, 8
    $region5: #{tpu_custom_call.1} parent=1 // pred_fallthru
      _
    // Predicated region
    $region6: #{tpu_custom_call.1} parent=1 // pred_check
      _
    $region7: #{tpu_custom_call.1} parent=1 // pred_check_branch
      %32 = sbr.rel (0) target = $region9
    $region8: #{tpu_custom_call.1} parent=1 // pred_region
      %34 = vsyncadd [#allocation8], 0
      %s35 = sshll.u32 %s2, 4
      %s36 = int_to_ptr.hbm [resolvable:$true] %s35
      %s37 = sshll.u32 [#allocation7], 4
      %s38 = int_to_ptr.vmem [resolvable:$true] %s37
      %43 = dma.hbm_to_vmem [thread:$0]  %s36, 6144, %s38, [#allocation8], 128, 128, 8
    $region9: #{tpu_custom_call.1} parent=1 // pred_fallthru
      _
    // Predicated region
    $region10: #{tpu_custom_call.1} parent=1 // pred_check
      _
    $region11: #{tpu_custom_call.1} parent=1 // pred_check_branch
      %45 = sbr.rel (0) target = $region13
    $region12: #{tpu_custom_call.1} parent=1 // pred_region
      _
    $region13: #{tpu_custom_call.1} parent=1 // pred_fallthru
      _
    // Predicated region
    $region14: #{tpu_custom_call.1} parent=1 // pred_check
      _
    $region15: #{tpu_custom_call.1} parent=1 // pred_check_branch
      %47 = sbr.rel (0) target = $region17
    $region16: #{tpu_custom_call.1} parent=1 // pred_region
      _
    $region17: #{tpu_custom_call.1} parent=1 // pred_fallthru
      _
    // Predicated region
    $region18: #{tpu_custom_call.1} parent=1 // pred_check
      _
    $region19: #{tpu_custom_call.1} parent=1 // pred_check_branch
      %49 = sbr.rel (0) target = $region21
    $region20: #{tpu_custom_call.1} parent=1 // pred_region
      %51 = vsyncadd [#allocation8], 0
      %s52 = sshll.u32 %s5, 4
      %s53 = int_to_ptr.hbm [resolvable:$true] %s52
      %s54 = sshll.u32 [#allocation9], 4
      %s55 = int_to_ptr.vmem [resolvable:$true] %s54
      %60 = dma.hbm_to_vmem [thread:$0]  %s53, 6144, %s55, [#allocation8], 128, 128, 8
    $region21: #{tpu_custom_call.1} parent=1 // pred_fallthru
      _
    // Predicated region
    $region22: #{tpu_custom_call.1} parent=1 // pred_check
      _
    $region23: #{tpu_custom_call.1} parent=1 // pred_check_branch
      %62 = sbr.rel (0) target = $region25
    $region24: #{tpu_custom_call.1} parent=1 // pred_region
      _
    $region25: #{tpu_custom_call.1} parent=1 // pred_fallthru
      _
    // Predicated region
    $region26: #{tpu_custom_call.1} parent=1 // pred_check
      _
    $region27: #{tpu_custom_call.1} parent=1 // pred_check_branch
      %64 = sbr.rel (0) target = $region29
    $region28: #{tpu_custom_call.1} parent=1 // pred_region
      _
    $region29: #{tpu_custom_call.1} parent=1 // pred_fallthru
      _
    // Predicated region
    $region30: #{tpu_custom_call.1} parent=1 // pred_check
      _
    $region31: #{tpu_custom_call.1} parent=1 // pred_check_branch
      %66 = sbr.rel (0) target = $region33
    $region32: #{tpu_custom_call.1} parent=1 // pred_region
      %68 = vsyncadd [#allocation11], 0
      %s69 = sshll.u32 %s8, 4
      %s70 = int_to_ptr.hbm [resolvable:$true] %s69
      %s71 = sshll.u32 [#allocation10], 4
      %s72 = int_to_ptr.vmem [resolvable:$true] %s71
      %77 = dma.hbm_to_vmem [thread:$0]  %s70, 2048, %s72, [#allocation11], 128, 128, 8
    $region33: #{tpu_custom_call.1} parent=1 // pred_fallthru
      _
    // Predicated region
    $region34: #{tpu_custom_call.1} parent=1 // pred_check
      _
    $region35: #{tpu_custom_call.1} parent=1 // pred_check_branch
      %79 = sbr.rel (0) target = $region37
    $region36: #{tpu_custom_call.1} parent=1 // pred_region
      %81 = dma.done [#allocation5], 512
    $region37: #{tpu_custom_call.1} parent=1 // pred_fallthru
      _
    // Predicated region
    $region38: #{tpu_custom_call.1} parent=1 // pred_check
      _
    $region39: #{tpu_custom_call.1} parent=1 // pred_check_branch
      %83 = sbr.rel (0) target = $region41
    $region40: #{tpu_custom_call.1} parent=1 // pred_region
      %85 = dma.done [#allocation8], 6144
    $region41: #{tpu_custom_call.1} parent=1 // pred_fallthru
      _
    // Predicated region
    $region42: #{tpu_custom_call.1} parent=1 // pred_check
      _
    $region43: #{tpu_custom_call.1} parent=1 // pred_check_branch
      %87 = sbr.rel (0) target = $region45
    $region44: #{tpu_custom_call.1} parent=1 // pred_region
      %89 = dma.done [#allocation8], 6144
    $region45: #{tpu_custom_call.1} parent=1 // pred_fallthru
      _
    // Predicated region
    $region46: #{tpu_custom_call.1} parent=1 // pred_check
      _
    $region47: #{tpu_custom_call.1} parent=1 // pred_check_branch
      %91 = sbr.rel (0) target = $region49
    $region48: #{tpu_custom_call.1} parent=1 // pred_region
      %93 = dma.done [#allocation11], 2048
    $region49: #{tpu_custom_call.1} parent=1 // pred_fallthru
      _
    %s94 = scalar_lea.vmem [#allocation2], 8
    %s95 = sshll.u32 %s0, 4
    %s96 = int_to_ptr.hbm [resolvable:$true] %s95
    %s97 = sshll.u32 %s94, 4
    %s98 = int_to_ptr.vmem [resolvable:$true] %s97
    %102 = dma.hbm_to_vmem [thread:$0]  %s96, 512, %s98, [#allocation3], 256, 512, 16
    %103 = vst [vmem:[#allocation2 + $0x6] sm:$0x3] 0.0
    %104 = vst [vmem:[#allocation2 + $0x26] sm:$0x3] 0.0
    %105 = vst [vmem:[#allocation2 + $0x18] sm:$0x3] 0.0
    %106 = vst [vmem:[#allocation2 + $0x38] sm:$0x3] 0.0
    %s107 = smul.u32 2, 16
    %s108 = smul.u32 %s107, 1
    %s109 = sshll.u32 %s108, 4
    %110 = dma.done [#allocation3], %s109
    %v111 = vld [vmem:[#allocation2 + $0x6] sm:$0xff]
    %v112 = vld [vmem:[#allocation2 + $0xe] sm:$0xff]
    %v113 = vld [vmem:[#allocation2 + $0x26] sm:$0xff]
    %v114 = vld [vmem:[#allocation2 + $0x2e] sm:$0xff]
    %v115 = vld [vmem:[#allocation7] sm:$0xff]
    %v116 = vld [vmem:[#allocation7 + $0x8] sm:$0xff]
    %v117 = vld [vmem:[#allocation7 + $0x10] sm:$0xff]
    %v118 = vld [vmem:[#allocation7 + $0x18] sm:$0xff]
    %v119 = vld [vmem:[#allocation7 + $0x20] sm:$0xff]
    %v120 = vld [vmem:[#allocation7 + $0x28] sm:$0xff]
    %v121 = vld [vmem:[#allocation7 + $0x30] sm:$0xff]
    %v122 = vld [vmem:[#allocation7 + $0x38] sm:$0xff]
    %v123 = vld [vmem:[#allocation7 + $0x40] sm:$0xff]
    %v124 = vld [vmem:[#allocation7 + $0x48] sm:$0xff]
    %v125 = vld [vmem:[#allocation7 + $0x50] sm:$0xff]
    %v126 = vld [vmem:[#allocation7 + $0x58] sm:$0xff]
    %v127 = vld [vmem:[#allocation7 + $0x60] sm:$0xff]
    %v128 = vld [vmem:[#allocation7 + $0x68] sm:$0xff]
    %v129 = vld [vmem:[#allocation7 + $0x70] sm:$0xff]
    %v130 = vld [vmem:[#allocation7 + $0x78] sm:$0xff]
    %v131 = vld [vmem:[#allocation2 + $0x8] sm:$0xff]
    %v132 = vld [vmem:[#allocation2 + $0x10] sm:$0xff]
    %v133 = vld [vmem:[#allocation2 + $0x28] sm:$0xff]
    %v134 = vld [vmem:[#allocation2 + $0x30] sm:$0xff]
    %s135 = scalar_lea.vmem [#allocation7], 128
    %v136 = vld [vmem:[%s135] sm:$0xff]
    %v137 = vld [vmem:[%s135 + $0x8] sm:$0xff]
    %v138 = vld [vmem:[%s135 + $0x10] sm:$0xff]
    %v139 = vld [vmem:[%s135 + $0x18] sm:$0xff]
    %v140 = vld [vmem:[%s135 + $0x20] sm:$0xff]
    %v141 = vld [vmem:[%s135 + $0x28] sm:$0xff]
    %v142 = vld [vmem:[%s135 + $0x30] sm:$0xff]
    %v143 = vld [vmem:[%s135 + $0x38] sm:$0xff]
    %v144 = vld [vmem:[%s135 + $0x40] sm:$0xff]
    %v145 = vld [vmem:[%s135 + $0x48] sm:$0xff]
    %v146 = vld [vmem:[%s135 + $0x50] sm:$0xff]
    %v147 = vld [vmem:[%s135 + $0x58] sm:$0xff]
    %v148 = vld [vmem:[%s135 + $0x60] sm:$0xff]
    %v149 = vld [vmem:[%s135 + $0x68] sm:$0xff]
    %v150 = vld [vmem:[%s135 + $0x70] sm:$0xff]
    %v151 = vld [vmem:[%s135 + $0x78] sm:$0xff]
    %152 = vmatpush.msra.mxu0 %v151
    %153 = vmatpush.msra.mxu0 %v150
    %154 = vmatpush.msra.mxu0 %v149
    %155 = vmatpush.msra.mxu0 %v148
    %156 = vmatpush.msra.mxu0 %v147
    %157 = vmatpush.msra.mxu0 %v146
    %158 = vmatpush.msra.mxu0 %v145
    %159 = vmatpush.msra.mxu0 %v144
    %160 = vmatpush.msra.mxu0 %v143
    %161 = vmatpush.msra.mxu0 %v142
    %162 = vmatpush.msra.mxu0 %v141
    %163 = vmatpush.msra.mxu0 %v140
    %164 = vmatpush.msra.mxu0 %v139
    %165 = vmatpush.msra.mxu0 %v138
    %166 = vmatpush.msra.mxu0 %v137
    %167 = vmatpush.msra.mxu0 %v136
    %168 = vmatmul.f32.gmra.mxu0 %v131
    %v169 = vpop.f32.mrf.mxu0
    %v170 = vadd.f32 0.0, %v169
    %171 = vmatmul.f32.gmra.mxu0 %v132
    %v172 = vpop.f32.mrf.mxu0
    %v173 = vadd.f32 0.0, %v172
    %174 = vmatmul.f32.gmra.mxu0 %v133
    %v175 = vpop.f32.mrf.mxu0
    %v176 = vadd.f32 0.0, %v175
    %177 = vmatmul.f32.gmra.mxu0 %v134
    %v178 = vpop.f32.mrf.mxu0
    %v179 = vadd.f32 0.0, %v178
    %180 = vdwg.mxu0
    %181 = vmatpush.msra.mxu0 %v130
    %182 = vmatpush.msra.mxu0 %v129
    %183 = vmatpush.msra.mxu0 %v128
    %184 = vmatpush.msra.mxu0 %v127
    %185 = vmatpush.msra.mxu0 %v126
    %186 = vmatpush.msra.mxu0 %v125
    %187 = vmatpush.msra.mxu0 %v124
    %188 = vmatpush.msra.mxu0 %v123
    %189 = vmatpush.msra.mxu0 %v122
    %190 = vmatpush.msra.mxu0 %v121
    %191 = vmatpush.msra.mxu0 %v120
    %192 = vmatpush.msra.mxu0 %v119
    %193 = vmatpush.msra.mxu0 %v118
    %194 = vmatpush.msra.mxu0 %v117
    %195 = vmatpush.msra.mxu0 %v116
    %196 = vmatpush.msra.mxu0 %v115
    %197 = vmatmul.f32.gmra.mxu0 %v111
    %v198 = vpop.f32.mrf.mxu0
    %v199 = vadd.f32 %v170, %v198
    %200 = vmatmul.f32.gmra.mxu0 %v112
    %v201 = vpop.f32.mrf.mxu0
    %v202 = vadd.f32 %v173, %v201
    %203 = vmatmul.f32.gmra.mxu0 %v113
    %v204 = vpop.f32.mrf.mxu0
    %v205 = vadd.f32 %v176, %v204
    %206 = vmatmul.f32.gmra.mxu0 %v114
    %v207 = vpop.f32.mrf.mxu0
    %v208 = vadd.f32 %v179, %v207
    %209 = vdwg.mxu0
    %v210 = vld [vmem:[#allocation2 + $0xa] sm:$0xff]
    %v211 = vld [vmem:[#allocation2 + $0x12] sm:$0xff]
    %v212 = vld [vmem:[#allocation2 + $0x2a] sm:$0xff]
    %v213 = vld [vmem:[#allocation2 + $0x32] sm:$0xff]
    %s214 = scalar_lea.vmem [#allocation7], 256
    %v215 = vld [vmem:[%s214] sm:$0xff]
    %v216 = vld [vmem:[%s214 + $0x8] sm:$0xff]
    %v217 = vld [vmem:[%s214 + $0x10] sm:$0xff]
    %v218 = vld [vmem:[%s214 + $0x18] sm:$0xff]
    %v219 = vld [vmem:[%s214 + $0x20] sm:$0xff]
    %v220 = vld [vmem:[%s214 + $0x28] sm:$0xff]
    %v221 = vld [vmem:[%s214 + $0x30] sm:$0xff]
    %v222 = vld [vmem:[%s214 + $0x38] sm:$0xff]
    %v223 = vld [vmem:[%s214 + $0x40] sm:$0xff]
    %v224 = vld [vmem:[%s214 + $0x48] sm:$0xff]
    %v225 = vld [vmem:[%s214 + $0x50] sm:$0xff]
    %v226 = vld [vmem:[%s214 + $0x58] sm:$0xff]
    %v227 = vld [vmem:[%s214 + $0x60] sm:$0xff]
    %v228 = vld [vmem:[%s214 + $0x68] sm:$0xff]
    %v229 = vld [vmem:[%s214 + $0x70] sm:$0xff]
    %v230 = vld [vmem:[%s214 + $0x78] sm:$0xff]
    %231 = vmatpush.msra.mxu0 %v230
    %232 = vmatpush.msra.mxu0 %v229
    %233 = vmatpush.msra.mxu0 %v228
    %234 = vmatpush.msra.mxu0 %v227
    %235 = vmatpush.msra.mxu0 %v226
    %236 = vmatpush.msra.mxu0 %v225
    %237 = vmatpush.msra.mxu0 %v224
    %238 = vmatpush.msra.mxu0 %v223
    %239 = vmatpush.msra.mxu0 %v222
    %240 = vmatpush.msra.mxu0 %v221
    %241 = vmatpush.msra.mxu0 %v220
    %242 = vmatpush.msra.mxu0 %v219
    %243 = vmatpush.msra.mxu0 %v218
    %244 = vmatpush.msra.mxu0 %v217
    %245 = vmatpush.msra.mxu0 %v216
    %246 = vmatpush.msra.mxu0 %v215
    %247 = vmatmul.f32.gmra.mxu0 %v210
    %v248 = vpop.f32.mrf.mxu0
    %v249 = vadd.f32 0.0, %v248
    %250 = vmatmul.f32.gmra.mxu0 %v211
    %v251 = vpop.f32.mrf.mxu0
    %v252 = vadd.f32 0.0, %v251
    %253 = vmatmul.f32.gmra.mxu0 %v212
    %v254 = vpop.f32.mrf.mxu0
    %v255 = vadd.f32 0.0, %v254
    %256 = vmatmul.f32.gmra.mxu0 %v213
    %v257 = vpop.f32.mrf.mxu0
    %v258 = vadd.f32 0.0, %v257
    %259 = vdwg.mxu0
    %v260 = vadd.f32 %v199, %v249
    %v261 = vadd.f32 %v202, %v252
    %v262 = vadd.f32 %v205, %v255
    %v263 = vadd.f32 %v208, %v258
    %vm264 = vcmask 261120
    %v266 = vsel %vm264, 1.0, 0
    %268 = vmatpush.msra.mxu0 0.0
    %269 = vmatpush.msra.mxu0 0.0
    %270 = vmatpush.msra.mxu0 0.0
    %271 = vmatpush.msra.mxu0 0.0
    %272 = vmatpush.msra.mxu0 0.0
    %273 = vmatpush.msra.mxu0 0.0
    %274 = vmatpush.msra.mxu0 0.0
    %275 = vmatpush.msra.mxu0 0.0
    %276 = vmatpush.msra.mxu0 0.0
    %277 = vmatpush.msra.mxu0 0.0
    %278 = vmatpush.msra.mxu0 0.0
    %279 = vmatpush.msra.mxu0 0.0
    %280 = vmatpush.msra.mxu0 %v263
    %281 = vmatpush.msra.mxu0 %v262
    %282 = vmatpush.msra.mxu0 %v261
    %283 = vmatpush.msra.mxu0 %v260
    %284 = vmatmul.f32.gmra.mxu0 %v266
    %v285 = vpop.f32.mrf.mxu0
    %v286 = vadd.f32 0.0, %v285
    %287 = vdwg.mxu0
    %v288 = vmul.f32 %v260, %v260
    %v289 = vmul.f32 %v261, %v261
    %v290 = vmul.f32 %v262, %v262
    %v291 = vmul.f32 %v263, %v263
    %292 = vmatpush.msra.mxu0 0.0
    %293 = vmatpush.msra.mxu0 0.0
    %294 = vmatpush.msra.mxu0 0.0
    %295 = vmatpush.msra.mxu0 0.0
    %296 = vmatpush.msra.mxu0 0.0
    %297 = vmatpush.msra.mxu0 0.0
    %298 = vmatpush.msra.mxu0 0.0
    %299 = vmatpush.msra.mxu0 0.0
    %300 = vmatpush.msra.mxu0 0.0
    %301 = vmatpush.msra.mxu0 0.0
    %302 = vmatpush.msra.mxu0 0.0
    %303 = vmatpush.msra.mxu0 0.0
    %304 = vmatpush.msra.mxu0 %v291
    %305 = vmatpush.msra.mxu0 %v290
    %306 = vmatpush.msra.mxu0 %v289
    %307 = vmatpush.msra.mxu0 %v288
    %308 = vmatmul.f32.gmra.mxu0 %v266
    %v309 = vpop.f32.mrf.mxu0
    %v310 = vadd.f32 0.0, %v309
    %311 = vdwg.mxu0
    %v312 = vld [vmem:[#allocation10] sm:$0xff]
    %v313 = vld [vmem:[#allocation10 + $0x8] sm:$0xff]
    %v314 = vld [vmem:[#allocation10 + $0x10] sm:$0xff]
    %v315 = vld [vmem:[#allocation10 + $0x18] sm:$0xff]
    %v316 = vld [vmem:[#allocation10 + $0x20] sm:$0xff]
    %v317 = vld [vmem:[#allocation10 + $0x28] sm:$0xff]
    %v318 = vld [vmem:[#allocation10 + $0x30] sm:$0xff]
    %v319 = vld [vmem:[#allocation10 + $0x38] sm:$0xff]
    %v320 = vld [vmem:[#allocation10 + $0x40] sm:$0xff]
    %v321 = vld [vmem:[#allocation10 + $0x48] sm:$0xff]
    %v322 = vld [vmem:[#allocation10 + $0x50] sm:$0xff]
    %v323 = vld [vmem:[#allocation10 + $0x58] sm:$0xff]
    %v324 = vld [vmem:[#allocation10 + $0x60] sm:$0xff]
    %v325 = vld [vmem:[#allocation10 + $0x68] sm:$0xff]
    %v326 = vld [vmem:[#allocation10 + $0x70] sm:$0xff]
    %v327 = vld [vmem:[#allocation10 + $0x78] sm:$0xff]
    %328 = vmatpush.msra.mxu0 %v327
    %329 = vmatpush.msra.mxu0 %v326
    %330 = vmatpush.msra.mxu0 %v325
    %331 = vmatpush.msra.mxu0 %v324
    %332 = vmatpush.msra.mxu0 %v323
    %333 = vmatpush.msra.mxu0 %v322
    %334 = vmatpush.msra.mxu0 %v321
    %335 = vmatpush.msra.mxu0 %v320
    %336 = vmatpush.msra.mxu0 %v319
    %337 = vmatpush.msra.mxu0 %v318
    %338 = vmatpush.msra.mxu0 %v317
    %339 = vmatpush.msra.mxu0 %v316
    %340 = vmatpush.msra.mxu0 %v315
    %341 = vmatpush.msra.mxu0 %v314
    %342 = vmatpush.msra.mxu0 %v313
    %343 = vmatpush.msra.mxu0 %v312
    %344 = vmatmul.f32.gmra.mxu0 %v286
    %v345 = vpop.f32.mrf.mxu0
    %v346 = vadd.f32 0.0, %v345
    %347 = vdwg.mxu0
    %348 = vmatpush.msra.mxu0 %v327
    %349 = vmatpush.msra.mxu0 %v326
    %350 = vmatpush.msra.mxu0 %v325
    %351 = vmatpush.msra.mxu0 %v324
    %352 = vmatpush.msra.mxu0 %v323
    %353 = vmatpush.msra.mxu0 %v322
    %354 = vmatpush.msra.mxu0 %v321
    %355 = vmatpush.msra.mxu0 %v320
    %356 = vmatpush.msra.mxu0 %v319
    %357 = vmatpush.msra.mxu0 %v318
    %358 = vmatpush.msra.mxu0 %v317
    %359 = vmatpush.msra.mxu0 %v316
    %360 = vmatpush.msra.mxu0 %v315
    %361 = vmatpush.msra.mxu0 %v314
    %362 = vmatpush.msra.mxu0 %v313
    %363 = vmatpush.msra.mxu0 %v312
    %364 = vmatmul.f32.gmra.mxu0 %v310
    %v365 = vpop.f32.mrf.mxu0
    %v366 = vadd.f32 0.0, %v365
    %367 = vdwg.mxu0
    %v368 = vmul.f32 %v346, %v346
    %v369 = vsub.f32 %v366, %v368
    %v370 = vperm.slane %v346, 0
    %v371 = vsub.f32 %v260, %v370
    %v372 = vsub.f32 %v261, %v370
    %v373 = vsub.f32 %v262, %v370
    %v374 = vsub.f32 %v263, %v370
    %v375 = vadd.f32 %v369, 1e-05
    %v376 = vrsqrt.pop %v375
    %v377 = vmul.f32 %v376, %v375
    %v378 = vmul.f32 %v377, %v376
    %v379 = vmul.f32 0.5, %v378
    %v380 = vsub.f32 1.5, %v379
    %v381 = vmul.f32 %v376, %v380
    %vm382 = vweird.f32 %v375
    %vm383 = vweird.f32 %v376
    %vm384 = vmor %vm382, %vm383
    %v385 = vsel %vm384, %v376, %v381
    %v386 = vperm.slane %v385, 0
    %v387 = vmul.f32 %v371, %v386
    %v388 = vmul.f32 %v372, %v386
    %v389 = vmul.f32 %v373, %v386
    %v390 = vmul.f32 %v374, %v386
    %v391 = vld [vmem:[%s3] sm:$0x1]
    %v393 = vperm.slane %v391, 0
    %v395 = vmul.f32 %v387, %v393
    %v396 = vmul.f32 %v388, %v393
    %v397 = vmul.f32 %v389, %v393
    %v398 = vmul.f32 %v390, %v393
    %v399 = vld [vmem:[%s4] sm:$0x1]
    %v401 = vperm.slane %v399, 0
    %v403 = vadd.f32 %v395, %v401
    %v404 = vadd.f32 %v396, %v401
    %v405 = vadd.f32 %v397, %v401
    %v406 = vadd.f32 %v398, %v401
    %v407 = vmax.f32 %v403, 0.0
    %v408 = vmax.f32 %v404, 0.0
    %v409 = vmax.f32 %v405, 0.0
    %v410 = vmax.f32 %v406, 0.0
    %411 = vst [vmem:[#allocation2 + $0x8] sm:$0xff] %v407
    %412 = vst [vmem:[#allocation2 + $0x10] sm:$0xff] %v408
    %413 = vst [vmem:[#allocation2 + $0x28] sm:$0xff] %v409
    %414 = vst [vmem:[#allocation2 + $0x30] sm:$0xff] %v410
    %v415 = vld [vmem:[#allocation2 + $0x6] sm:$0xff]
    %v416 = vld [vmem:[#allocation2 + $0xe] sm:$0xff]
    %v417 = vld [vmem:[#allocation2 + $0x26] sm:$0xff]
    %v418 = vld [vmem:[#allocation2 + $0x2e] sm:$0xff]
    %v419 = vld [vmem:[#allocation9] sm:$0xff]
    %v420 = vld [vmem:[#allocation9 + $0x8] sm:$0xff]
    %v421 = vld [vmem:[#allocation9 + $0x10] sm:$0xff]
    %v422 = vld [vmem:[#allocation9 + $0x18] sm:$0xff]
    %v423 = vld [vmem:[#allocation9 + $0x20] sm:$0xff]
    %v424 = vld [vmem:[#allocation9 + $0x28] sm:$0xff]
    %v425 = vld [vmem:[#allocation9 + $0x30] sm:$0xff]
    %v426 = vld [vmem:[#allocation9 + $0x38] sm:$0xff]
    %v427 = vld [vmem:[#allocation9 + $0x40] sm:$0xff]
    %v428 = vld [vmem:[#allocation9 + $0x48] sm:$0xff]
    %v429 = vld [vmem:[#allocation9 + $0x50] sm:$0xff]
    %v430 = vld [vmem:[#allocation9 + $0x58] sm:$0xff]
    %v431 = vld [vmem:[#allocation9 + $0x60] sm:$0xff]
    %v432 = vld [vmem:[#allocation9 + $0x68] sm:$0xff]
    %v433 = vld [vmem:[#allocation9 + $0x70] sm:$0xff]
    %v434 = vld [vmem:[#allocation9 + $0x78] sm:$0xff]
    %v435 = vld [vmem:[#allocation2 + $0x8] sm:$0xff]
    %v436 = vld [vmem:[#allocation2 + $0x10] sm:$0xff]
    %v437 = vld [vmem:[#allocation2 + $0x28] sm:$0xff]
    %v438 = vld [vmem:[#allocation2 + $0x30] sm:$0xff]
    %s439 = scalar_lea.vmem [#allocation9], 128
    %v440 = vld [vmem:[%s439] sm:$0xff]
    %v441 = vld [vmem:[%s439 + $0x8] sm:$0xff]
    %v442 = vld [vmem:[%s439 + $0x10] sm:$0xff]
    %v443 = vld [vmem:[%s439 + $0x18] sm:$0xff]
    %v444 = vld [vmem:[%s439 + $0x20] sm:$0xff]
    %v445 = vld [vmem:[%s439 + $0x28] sm:$0xff]
    %v446 = vld [vmem:[%s439 + $0x30] sm:$0xff]
    %v447 = vld [vmem:[%s439 + $0x38] sm:$0xff]
    %v448 = vld [vmem:[%s439 + $0x40] sm:$0xff]
    %v449 = vld [vmem:[%s439 + $0x48] sm:$0xff]
    %v450 = vld [vmem:[%s439 + $0x50] sm:$0xff]
    %v451 = vld [vmem:[%s439 + $0x58] sm:$0xff]
    %v452 = vld [vmem:[%s439 + $0x60] sm:$0xff]
    %v453 = vld [vmem:[%s439 + $0x68] sm:$0xff]
    %v454 = vld [vmem:[%s439 + $0x70] sm:$0xff]
    %v455 = vld [vmem:[%s439 + $0x78] sm:$0xff]
    %456 = vmatpush.msra.mxu0 %v455
    %457 = vmatpush.msra.mxu0 %v454
    %458 = vmatpush.msra.mxu0 %v453
    %459 = vmatpush.msra.mxu0 %v452
    %460 = vmatpush.msra.mxu0 %v451
    %461 = vmatpush.msra.mxu0 %v450
    %462 = vmatpush.msra.mxu0 %v449
    %463 = vmatpush.msra.mxu0 %v448
    %464 = vmatpush.msra.mxu0 %v447
    %465 = vmatpush.msra.mxu0 %v446
    %466 = vmatpush.msra.mxu0 %v445
    %467 = vmatpush.msra.mxu0 %v444
    %468 = vmatpush.msra.mxu0 %v443
    %469 = vmatpush.msra.mxu0 %v442
    %470 = vmatpush.msra.mxu0 %v441
    %471 = vmatpush.msra.mxu0 %v440
    %472 = vmatmul.f32.gmra.mxu0 %v435
    %v473 = vpop.f32.mrf.mxu0
    %v474 = vadd.f32 0.0, %v473
    %475 = vmatmul.f32.gmra.mxu0 %v436
    %v476 = vpop.f32.mrf.mxu0
    %v477 = vadd.f32 0.0, %v476
    %478 = vmatmul.f32.gmra.mxu0 %v437
    %v479 = vpop.f32.mrf.mxu0
    %v480 = vadd.f32 0.0, %v479
    %481 = vmatmul.f32.gmra.mxu0 %v438
    %v482 = vpop.f32.mrf.mxu0
    %v483 = vadd.f32 0.0, %v482
    %484 = vdwg.mxu0
    %485 = vmatpush.msra.mxu0 %v434
    %486 = vmatpush.msra.mxu0 %v433
    %487 = vmatpush.msra.mxu0 %v432
    %488 = vmatpush.msra.mxu0 %v431
    %489 = vmatpush.msra.mxu0 %v430
    %490 = vmatpush.msra.mxu0 %v429
    %491 = vmatpush.msra.mxu0 %v428
    %492 = vmatpush.msra.mxu0 %v427
    %493 = vmatpush.msra.mxu0 %v426
    %494 = vmatpush.msra.mxu0 %v425
    %495 = vmatpush.msra.mxu0 %v424
    %496 = vmatpush.msra.mxu0 %v423
    %497 = vmatpush.msra.mxu0 %v422
    %498 = vmatpush.msra.mxu0 %v421
    %499 = vmatpush.msra.mxu0 %v420
    %500 = vmatpush.msra.mxu0 %v419
    %501 = vmatmul.f32.gmra.mxu0 %v415
    %v502 = vpop.f32.mrf.mxu0
    %v503 = vadd.f32 %v474, %v502
    %504 = vmatmul.f32.gmra.mxu0 %v416
    %v505 = vpop.f32.mrf.mxu0
    %v506 = vadd.f32 %v477, %v505
    %507 = vmatmul.f32.gmra.mxu0 %v417
    %v508 = vpop.f32.mrf.mxu0
    %v509 = vadd.f32 %v480, %v508
    %510 = vmatmul.f32.gmra.mxu0 %v418
    %v511 = vpop.f32.mrf.mxu0
    %v512 = vadd.f32 %v483, %v511
    %513 = vdwg.mxu0
    %v514 = vld [vmem:[#allocation2 + $0xa] sm:$0xff]
    %v515 = vld [vmem:[#allocation2 + $0x12] sm:$0xff]
    %v516 = vld [vmem:[#allocation2 + $0x2a] sm:$0xff]
    %v517 = vld [vmem:[#allocation2 + $0x32] sm:$0xff]
    %s518 = scalar_lea.vmem [#allocation9], 256
    %v519 = vld [vmem:[%s518] sm:$0xff]
    %v520 = vld [vmem:[%s518 + $0x8] sm:$0xff]
    %v521 = vld [vmem:[%s518 + $0x10] sm:$0xff]
    %v522 = vld [vmem:[%s518 + $0x18] sm:$0xff]
    %v523 = vld [vmem:[%s518 + $0x20] sm:$0xff]
    %v524 = vld [vmem:[%s518 + $0x28] sm:$0xff]
    %v525 = vld [vmem:[%s518 + $0x30] sm:$0xff]
    %v526 = vld [vmem:[%s518 + $0x38] sm:$0xff]
    %v527 = vld [vmem:[%s518 + $0x40] sm:$0xff]
    %v528 = vld [vmem:[%s518 + $0x48] sm:$0xff]
    %v529 = vld [vmem:[%s518 + $0x50] sm:$0xff]
    %v530 = vld [vmem:[%s518 + $0x58] sm:$0xff]
    %v531 = vld [vmem:[%s518 + $0x60] sm:$0xff]
    %v532 = vld [vmem:[%s518 + $0x68] sm:$0xff]
    %v533 = vld [vmem:[%s518 + $0x70] sm:$0xff]
    %v534 = vld [vmem:[%s518 + $0x78] sm:$0xff]
    %535 = vmatpush.msra.mxu0 %v534
    %536 = vmatpush.msra.mxu0 %v533
    %537 = vmatpush.msra.mxu0 %v532
    %538 = vmatpush.msra.mxu0 %v531
    %539 = vmatpush.msra.mxu0 %v530
    %540 = vmatpush.msra.mxu0 %v529
    %541 = vmatpush.msra.mxu0 %v528
    %542 = vmatpush.msra.mxu0 %v527
    %543 = vmatpush.msra.mxu0 %v526
    %544 = vmatpush.msra.mxu0 %v525
    %545 = vmatpush.msra.mxu0 %v524
    %546 = vmatpush.msra.mxu0 %v523
    %547 = vmatpush.msra.mxu0 %v522
    %548 = vmatpush.msra.mxu0 %v521
    %549 = vmatpush.msra.mxu0 %v520
    %550 = vmatpush.msra.mxu0 %v519
    %551 = vmatmul.f32.gmra.mxu0 %v514
    %v552 = vpop.f32.mrf.mxu0
    %v553 = vadd.f32 0.0, %v552
    %554 = vmatmul.f32.gmra.mxu0 %v515
    %v555 = vpop.f32.mrf.mxu0
    %v556 = vadd.f32 0.0, %v555
    %557 = vmatmul.f32.gmra.mxu0 %v516
    %v558 = vpop.f32.mrf.mxu0
    %v559 = vadd.f32 0.0, %v558
    %560 = vmatmul.f32.gmra.mxu0 %v517
    %v561 = vpop.f32.mrf.mxu0
    %v562 = vadd.f32 0.0, %v561
    %563 = vdwg.mxu0
    %v564 = vadd.f32 %v503, %v553
    %v565 = vadd.f32 %v506, %v556
    %v566 = vadd.f32 %v509, %v559
    %v567 = vadd.f32 %v512, %v562
    %568 = vmatpush.msra.mxu0 0.0
    %569 = vmatpush.msra.mxu0 0.0
    %570 = vmatpush.msra.mxu0 0.0
    %571 = vmatpush.msra.mxu0 0.0
    %572 = vmatpush.msra.mxu0 0.0
    %573 = vmatpush.msra.mxu0 0.0
    %574 = vmatpush.msra.mxu0 0.0
    %575 = vmatpush.msra.mxu0 0.0
    %576 = vmatpush.msra.mxu0 0.0
    %577 = vmatpush.msra.mxu0 0.0
    %578 = vmatpush.msra.mxu0 0.0
    %579 = vmatpush.msra.mxu0 0.0
    %580 = vmatpush.msra.mxu0 %v567
    %581 = vmatpush.msra.mxu0 %v566
    %582 = vmatpush.msra.mxu0 %v565
    %583 = vmatpush.msra.mxu0 %v564
    %584 = vmatmul.f32.gmra.mxu0 %v266
    %v585 = vpop.f32.mrf.mxu0
    %v586 = vadd.f32 0.0, %v585
    %587 = vdwg.mxu0
    %v588 = vmul.f32 %v564, %v564
    %v589 = vmul.f32 %v565, %v565
    %v590 = vmul.f32 %v566, %v566
    %v591 = vmul.f32 %v567, %v567
    %592 = vmatpush.msra.mxu0 0.0
    %593 = vmatpush.msra.mxu0 0.0
    %594 = vmatpush.msra.mxu0 0.0
    %595 = vmatpush.msra.mxu0 0.0
    %596 = vmatpush.msra.mxu0 0.0
    %597 = vmatpush.msra.mxu0 0.0
    %598 = vmatpush.msra.mxu0 0.0
    %599 = vmatpush.msra.mxu0 0.0
    %600 = vmatpush.msra.mxu0 0.0
    %601 = vmatpush.msra.mxu0 0.0
    %602 = vmatpush.msra.mxu0 0.0
    %603 = vmatpush.msra.mxu0 0.0
    %604 = vmatpush.msra.mxu0 %v591
    %605 = vmatpush.msra.mxu0 %v590
    %606 = vmatpush.msra.mxu0 %v589
    %607 = vmatpush.msra.mxu0 %v588
    %608 = vmatmul.f32.gmra.mxu0 %v266
    %v609 = vpop.f32.mrf.mxu0
    %v610 = vadd.f32 0.0, %v609
    %611 = vdwg.mxu0
    %v612 = vld [vmem:[#allocation10] sm:$0xff]
    %v613 = vld [vmem:[#allocation10 + $0x8] sm:$0xff]
    %v614 = vld [vmem:[#allocation10 + $0x10] sm:$0xff]
    %v615 = vld [vmem:[#allocation10 + $0x18] sm:$0xff]
    %v616 = vld [vmem:[#allocation10 + $0x20] sm:$0xff]
    %v617 = vld [vmem:[#allocation10 + $0x28] sm:$0xff]
    %v618 = vld [vmem:[#allocation10 + $0x30] sm:$0xff]
    %v619 = vld [vmem:[#allocation10 + $0x38] sm:$0xff]
    %v620 = vld [vmem:[#allocation10 + $0x40] sm:$0xff]
    %v621 = vld [vmem:[#allocation10 + $0x48] sm:$0xff]
    %v622 = vld [vmem:[#allocation10 + $0x50] sm:$0xff]
    %v623 = vld [vmem:[#allocation10 + $0x58] sm:$0xff]
    %v624 = vld [vmem:[#allocation10 + $0x60] sm:$0xff]
    %v625 = vld [vmem:[#allocation10 + $0x68] sm:$0xff]
    %v626 = vld [vmem:[#allocation10 + $0x70] sm:$0xff]
    %v627 = vld [vmem:[#allocation10 + $0x78] sm:$0xff]
    %628 = vmatpush.msra.mxu0 %v627
    %629 = vmatpush.msra.mxu0 %v626
    %630 = vmatpush.msra.mxu0 %v625
    %631 = vmatpush.msra.mxu0 %v624
    %632 = vmatpush.msra.mxu0 %v623
    %633 = vmatpush.msra.mxu0 %v622
    %634 = vmatpush.msra.mxu0 %v621
    %635 = vmatpush.msra.mxu0 %v620
    %636 = vmatpush.msra.mxu0 %v619
    %637 = vmatpush.msra.mxu0 %v618
    %638 = vmatpush.msra.mxu0 %v617
    %639 = vmatpush.msra.mxu0 %v616
    %640 = vmatpush.msra.mxu0 %v615
    %641 = vmatpush.msra.mxu0 %v614
    %642 = vmatpush.msra.mxu0 %v613
    %643 = vmatpush.msra.mxu0 %v612
    %644 = vmatmul.f32.gmra.mxu0 %v586
    %v645 = vpop.f32.mrf.mxu0
    %v646 = vadd.f32 0.0, %v645
    %647 = vdwg.mxu0
    %648 = vmatpush.msra.mxu0 %v627
    %649 = vmatpush.msra.mxu0 %v626
    %650 = vmatpush.msra.mxu0 %v625
    %651 = vmatpush.msra.mxu0 %v624
    %652 = vmatpush.msra.mxu0 %v623
    %653 = vmatpush.msra.mxu0 %v622
    %654 = vmatpush.msra.mxu0 %v621
    %655 = vmatpush.msra.mxu0 %v620
    %656 = vmatpush.msra.mxu0 %v619
    %657 = vmatpush.msra.mxu0 %v618
    %658 = vmatpush.msra.mxu0 %v617
    %659 = vmatpush.msra.mxu0 %v616
    %660 = vmatpush.msra.mxu0 %v615
    %661 = vmatpush.msra.mxu0 %v614
    %662 = vmatpush.msra.mxu0 %v613
    %663 = vmatpush.msra.mxu0 %v612
    %664 = vmatmul.f32.gmra.mxu0 %v610
    %v665 = vpop.f32.mrf.mxu0
    %v666 = vadd.f32 0.0, %v665
    %667 = vdwg.mxu0
    %v668 = vmul.f32 %v646, %v646
    %v669 = vsub.f32 %v666, %v668
    %v670 = vperm.slane %v646, 0
    %v671 = vsub.f32 %v564, %v670
    %v672 = vsub.f32 %v565, %v670
    %v673 = vsub.f32 %v566, %v670
    %v674 = vsub.f32 %v567, %v670
    %v675 = vadd.f32 %v669, 1e-05
    %v676 = vrsqrt.pop %v675
    %v677 = vmul.f32 %v676, %v675
    %v678 = vmul.f32 %v677, %v676
    %v679 = vmul.f32 0.5, %v678
    %v680 = vsub.f32 1.5, %v679
    %v681 = vmul.f32 %v676, %v680
    %vm682 = vweird.f32 %v675
    %vm683 = vweird.f32 %v676
    %vm684 = vmor %vm682, %vm683
    %v685 = vsel %vm684, %v676, %v681
    %v686 = vperm.slane %v685, 0
    %v687 = vmul.f32 %v671, %v686
    %v688 = vmul.f32 %v672, %v686
    %v689 = vmul.f32 %v673, %v686
    %v690 = vmul.f32 %v674, %v686
    %v691 = vld [vmem:[%s6] sm:$0x1]
    %v693 = vperm.slane %v691, 0
    %v695 = vmul.f32 %v687, %v693
    %v696 = vmul.f32 %v688, %v693
    %v697 = vmul.f32 %v689, %v693
    %v698 = vmul.f32 %v690, %v693
    %v699 = vld [vmem:[%s7] sm:$0x1]
    %v701 = vperm.slane %v699, 0
    %v703 = vadd.f32 %v695, %v701
    %v704 = vadd.f32 %v696, %v701
    %v705 = vadd.f32 %v697, %v701
    %v706 = vadd.f32 %v698, %v701
    %v707 = vld [vmem:[#allocation4] sm:$0xff]
    %v708 = vld [vmem:[#allocation4 + $0x8] sm:$0xff]
    %v709 = vld [vmem:[#allocation4 + $0x10] sm:$0xff]
    %v710 = vld [vmem:[#allocation4 + $0x18] sm:$0xff]
    %v711 = vadd.f32 %v703, %v707
    %v712 = vadd.f32 %v704, %v708
    %v713 = vadd.f32 %v705, %v709
    %v714 = vadd.f32 %v706, %v710
    %v715 = vmax.f32 %v711, 0.0
    %v716 = vmax.f32 %v712, 0.0
    %v717 = vmax.f32 %v713, 0.0
    %v718 = vmax.f32 %v714, 0.0
    %719 = vst [vmem:[#allocation12] sm:$0xff] %v715
    %720 = vst [vmem:[#allocation12 + $0x8] sm:$0xff] %v716
    %721 = vst [vmem:[#allocation12 + $0x10] sm:$0xff] %v717
    %722 = vst [vmem:[#allocation12 + $0x18] sm:$0xff] %v718
    // Predicated region
    $region50: #{tpu_custom_call.1} parent=1 // pred_check
      _
    $region51: #{tpu_custom_call.1} parent=1 // pred_check_branch
      %724 = sbr.rel (0) target = $region53
    $region52: #{tpu_custom_call.1} parent=1 // pred_region
      %726 = vsyncadd [#allocation6], 0
      %s727 = sshll.u32 [#allocation12], 4
      %s728 = int_to_ptr.vmem [resolvable:$true] %s727
      %s729 = sshll.u32 %s9, 4
      %s730 = int_to_ptr.hbm [resolvable:$true] %s729
      %735 = dma.vmem_to_hbm [thread:$0]  %s728, 512, %s730, [#allocation6], 128, 128, 8
    $region53: #{tpu_custom_call.1} parent=1 // pred_fallthru
      _
    // Predicated region
    $region54: #{tpu_custom_call.1} parent=1 // pred_check
      _
    $region55: #{tpu_custom_call.1} parent=1 // pred_check_branch
      %737 = sbr.rel (0) target = $region57
    $region56: #{tpu_custom_call.1} parent=1 // pred_region
      %739 = dma.done [#allocation6], 512
    $region57: #{tpu_custom_call.1} parent=1 // pred_fallthru
      _
    %740 = vsyncpa [#allocation5], 1
    %741 = vsyncpa [#allocation8], 1
    %742 = vsyncpa [#allocation11], 1
    %743 = vsyncpa [#allocation6], 1
  %744 = vsyncmov [#allocation3]
  %s745 = vpop.sfrf %744
  %p746 = scmp.eq.s32.totalorder %s745, 0
  %p747 = pneg %p746
  %749 = shalt.err (%p747)

</llo_original>
